<compile_context>
chip_gen: v5e
topology: v5e:2x2
jax: 0.10.0
libtpu: 0.0.40
codegen_flags: <defaults>
</compile_context>

<pallas_src>
import math

import jax
import jax.numpy as jnp
from jax.experimental import pallas as pl
from jax.experimental.pallas import tpu as pltpu


class WeightSpaceFeatures:
    def __init__(self, weights, biases):
        self.weights = tuple(weights)
        self.biases = tuple(biases)


_TARGET_BLOCK_BYTES = 4 * 1024 * 1024    # ~4 MiB blocks: 2(in)+2(out) buffers fit all gens
_VMEM_LIMIT_BYTES = 32 * 1024 * 1024


def _row_tile(num_rows, row_bytes, target_bytes=_TARGET_BLOCK_BYTES):
    """Largest row tile that divides num_rows, is a multiple of 8 (or the full extent) and
    keeps one (rows, full-width) block under target_bytes (best effort)."""
    max_rows = max(1, target_bytes // max(1, row_bytes))
    if num_rows <= max_rows:
        return num_rows
    best = 0
    r = 8
    while r <= max_rows and r < num_rows:
        if num_rows % r == 0:
            best = r
        r += 8
    # Fallback: full extent (one huge block) if no aligned divisor fits the budget.
    return best if best > 0 else num_rows


# ----------------------------------------------------------------------------
# Kernels: pure lane-dense streaming multiplies (mem-bound; VPU/MXU have slack)
# ----------------------------------------------------------------------------
def _row_scale_kernel(x_ref, s_ref, o_ref):
    # x: (RT, N), s: (RT, 1) -> per-row scale broadcast across lanes.
    o_ref[...] = (x_ref[...] * s_ref[...]).astype(o_ref.dtype)


def _phase_scale_kernel(x_ref, s_ref, pat_ref, o_ref):
    # x: (RT, N), s: (RT, P), pat: (P, N) one-hot phase selector (column j -> phase j % P).
    # The (RT, N) mask is rebuilt on the otherwise-idle MXU: mask[r, j] = s[r, j % P].
    mask = jnp.dot(s_ref[...], pat_ref[...], preferred_element_type=jnp.float32)
    o_ref[...] = (x_ref[...] * mask).astype(o_ref.dtype)


def _elementwise_mask_kernel(x_ref, m_ref, o_ref):
    o_ref[...] = (x_ref[...] * m_ref[...]).astype(o_ref.dtype)


# ----------------------------------------------------------------------------
# Channel dropout on a 2-D (rows, width) view of a weight tensor
# ----------------------------------------------------------------------------
def _apply_channel_dropout_2d(x2d, scale, pattern=None):
    R, N = x2d.shape
    itemsize = x2d.dtype.itemsize
    rt = _row_tile(R, N * itemsize)
    grid = (R // rt,)

    x_spec = pl.BlockSpec((rt, N), lambda i: (i, 0))
    s_spec = pl.BlockSpec((rt, scale.shape[1]), lambda i: (i, 0))
    cparams = pltpu.CompilerParams(
        dimension_semantics=("parallel",),        # independent row blocks (2 TCs on v7x)
        vmem_limit_bytes=_VMEM_LIMIT_BYTES)
    out_shape = jax.ShapeDtypeStruct((R, N), x2d.dtype)

    if pattern is None:
        cost = pl.CostEstimate(flops=R * N, transcendentals=0,
                               bytes_accessed=2 * R * N * itemsize)
        return pl.pallas_call(
            _row_scale_kernel, out_shape=out_shape, grid=grid,
            in_specs=[x_spec, s_spec], out_specs=x_spec,
            compiler_params=cparams, cost_estimate=cost,
        )(x2d, scale)

    P = pattern.shape[0]
    pat_spec = pl.BlockSpec((P, N), lambda i: (0, 0))   # constant block -> stays resident
    cost = pl.CostEstimate(flops=2 * R * N * P + R * N, transcendentals=0,
                           bytes_accessed=2 * R * N * itemsize)
    return pl.pallas_call(
        _phase_scale_kernel, out_shape=out_shape, grid=grid,
        in_specs=[x_spec, s_spec, pat_spec], out_specs=x_spec,
        compiler_params=cparams, cost_estimate=cost,
    )(x2d, scale, pattern)


def channel_dropout_matrix(w, p, key):
    """Dropout2d-style channel dropout on an NFN weight tensor, done in the original memory
    layout (no transpose round-trip for conv weights)."""
    shape = w.shape
    B, C = shape[0], shape[1]
    is_conv = len(shape) > 4
    hw = int(shape[-2] * shape[-1]) if is_conv else 1
    R = B * C
    N = math.prod(shape[2:])                    # O*I*(H*W)
    x2d = w.reshape(R, N)                       # contiguous => free view

    keep = jax.random.bernoulli(key, 1.0 - p, (R, hw))
    scale = keep.astype(jnp.float32) * (1.0 / (1.0 - p))        # 0 or 1/(1-p)

    if is_conv:
        # one-hot phase pattern: pattern[k, j] = 1.0 iff j % (H*W) == k  (tiny: HW x N)
        phase = jnp.arange(N, dtype=jnp.int32) % hw
        pattern = (phase[None, :] ==
                   jnp.arange(hw, dtype=jnp.int32)[:, None]).astype(jnp.float32)
        out2d = _apply_channel_dropout_2d(x2d, scale, pattern)
    else:
        out2d = _apply_channel_dropout_2d(x2d, scale)           # scale is (R, 1)
    return out2d.reshape(shape)


# ----------------------------------------------------------------------------
# Element-wise dropout over ALL biases, fused into one padded lane-dense slab
# ----------------------------------------------------------------------------
_BIAS_LANES = 512
_BIAS_ROW_TILE = 64          # 64 * 512 * 4 B = 128 KiB per block


def fused_bias_dropout(biases, p, key):
    biases = list(biases)
    if not biases:
        return []
    dtype = biases[0].dtype
    flats = [b.reshape(-1).astype(dtype) for b in biases]
    sizes = [int(f.shape[0]) for f in flats]
    total = sum(sizes)
    chunk = _BIAS_LANES * _BIAS_ROW_TILE
    total_p = ((total + chunk - 1) // chunk) * chunk
    flat = jnp.concatenate(flats + [jnp.zeros((total_p - total,), dtype)])
    slab = flat.reshape(total_p // _BIAS_LANES, _BIAS_LANES)
    rows = slab.shape[0]

    keep = jax.random.bernoulli(key, 1.0 - p, slab.shape)
    mask = keep.astype(jnp.float32) * (1.0 / (1.0 - p))

    spec = pl.BlockSpec((_BIAS_ROW_TILE, _BIAS_LANES), lambda i: (i, 0))
    out = pl.pallas_call(
        _elementwise_mask_kernel,
        out_shape=jax.ShapeDtypeStruct(slab.shape, dtype),
        grid=(rows // _BIAS_ROW_TILE,),
        in_specs=[spec, spec],
        out_specs=spec,
        compiler_params=pltpu.CompilerParams(
            dimension_semantics=("parallel",),
            vmem_limit_bytes=_VMEM_LIMIT_BYTES),
    )(slab, mask)

    out_flat = out.reshape(-1)
    result, off = [], 0
    for b, n in zip(biases, sizes):
        result.append(out_flat[off:off + n].astype(b.dtype).reshape(b.shape))
        off += n
    return result


# ----------------------------------------------------------------------------
# Module-level forward
# ----------------------------------------------------------------------------
def channel_dropout_forward(x: WeightSpaceFeatures, p: float, key) -> WeightSpaceFeatures:
    if p == 0.0:
        return WeightSpaceFeatures(x.weights, x.biases)
    if p >= 1.0:                                   # PyTorch p=1 -> all zeros (avoid inf scale)
        return WeightSpaceFeatures([jnp.zeros_like(w) for w in x.weights],
                                   [jnp.zeros_like(b) for b in x.biases])
    kw, kb = jax.random.split(key)
    weights = [channel_dropout_matrix(w, p, jax.random.fold_in(kw, i))
               for i, w in enumerate(x.weights)]
    biases = fused_bias_dropout(x.biases, p, kb)
    return WeightSpaceFeatures(weights, biases)


if __name__ == "__main__":
    key = jax.random.PRNGKey(0)
    k1, k2, k3, k4, kdrop = jax.random.split(key, 5)

    # Small synthetic weight-space features (one linear layer, one 3x3 conv layer).
    w_lin = jax.random.normal(k1, (2, 4, 16, 32), jnp.float32)         # (B, C, O, I)
    w_conv = jax.random.normal(k2, (2, 4, 8, 16, 3, 3), jnp.float32)   # (B, C, O, I, H, W)
    b_lin = jax.random.normal(k3, (2, 4, 16), jnp.float32)
    b_conv = jax.random.normal(k4, (2, 4, 8), jnp.float32)

    p = 0.5
    feats = WeightSpaceFeatures((w_lin, w_conv), (b_lin, b_conv))
    out = channel_dropout_forward(feats, p, kdrop)
    jax.block_until_ready(out.weights + tuple(out.biases))

    scale_val = 1.0 / (1.0 - p)

    # Linear weights: every (b, c) slice is either all-zero or exactly input * 1/(1-p).
    ratio = jnp.where(jnp.abs(w_lin) > 1e-3, out.weights[0] / w_lin, jnp.nan)
    cmax = jnp.nanmax(ratio, axis=(2, 3))
    cmin = jnp.nanmin(ratio, axis=(2, 3))
    assert bool(jnp.all(cmax - cmin < 1e-4)), "channel mask not constant over (O, I)"
    assert bool(jnp.all(jnp.isclose(cmax, 0.0, atol=1e-4) |
                        jnp.isclose(cmax, scale_val, atol=1e-4))), "wrong dropout scale"

    # Conv weights: each (b, c, h, w) "channel" is constant over (O, I) and 0 or 1/(1-p).
    ratio_c = jnp.where(jnp.abs(w_conv) > 1e-3, out.weights[1] / w_conv, jnp.nan)
    cmax_c = jnp.nanmax(ratio_c, axis=(2, 3))    # -> (B, C, H, W)
    cmin_c = jnp.nanmin(ratio_c, axis=(2, 3))
    assert bool(jnp.all(cmax_c - cmin_c < 1e-4)), "conv channel mask not constant over (O, I)"
    assert bool(jnp.all(jnp.isclose(cmax_c, 0.0, atol=1e-4) |
                        jnp.isclose(cmax_c, scale_val, atol=1e-4))), "wrong conv dropout scale"

    # Biases: element-wise 0 or 1/(1-p).
    for b_in, b_out in zip((b_lin, b_conv), out.biases):
        r = jnp.where(jnp.abs(b_in) > 1e-3, b_out / b_in, jnp.nan)
        assert bool(jnp.all(jnp.isnan(r) | jnp.isclose(r, 0.0, atol=1e-4) |
                            jnp.isclose(r, scale_val, atol=1e-4))), "wrong bias dropout"

    print("KERNEL_OK")
</pallas_src>

<mosaic_0001>
module attributes {stable_mosaic.version = 11 : i64} {
  func.func @_row_scale_kernel(%arg0: i32, %arg1: memref<8x512xf32, #tpu.memory_space<vmem>>, %arg2: memref<8x1xf32, #tpu.memory_space<vmem>>, %arg3: memref<8x512xf32, #tpu.memory_space<vmem>>) attributes {dimension_semantics = [#tpu.dimension_semantics<parallel>], iteration_bounds = array<i64: 1>, scalar_prefetch = 0 : i64, scratch_operands = 0 : i64, tpu.core_type = #tpu.core_type<tc>, window_params = [{transform_indices = @transform_0, window_bounds = array<i64: 8, 512>}, {transform_indices = @transform_1, window_bounds = array<i64: 8, 1>}, {transform_indices = @transform_2, window_bounds = array<i64: 8, 512>}]} {
    %c0 = arith.constant 0 : index
    %c0_0 = arith.constant 0 : index
    %0 = vector.load %arg1[%c0, %c0_0] : memref<8x512xf32, #tpu.memory_space<vmem>>, vector<8x512xf32>
    %c0_1 = arith.constant 0 : index
    %c0_2 = arith.constant 0 : index
    %1 = vector.load %arg2[%c0_1, %c0_2] : memref<8x1xf32, #tpu.memory_space<vmem>>, vector<8x1xf32>
    %2 = vector.broadcast %1 : vector<8x1xf32> to vector<8x512xf32>
    %3 = arith.mulf %0, %2 : vector<8x512xf32>
    %c0_3 = arith.constant 0 : index
    %c0_4 = arith.constant 0 : index
    %4 = vector.load %arg3[%c0_3, %c0_4] : memref<8x512xf32, #tpu.memory_space<vmem>>, vector<8x512xf32>
    tpu.vector_store %arg3[%c0_3, %c0_4], %3 {strides = array<i32>} : memref<8x512xf32, #tpu.memory_space<vmem>>, vector<8x512xf32>,
    return
  }
  func.func @transform_0(%arg0: i32) -> (i32, i32) {
    %c0_i32 = arith.constant 0 : i32
    %c0_i32_0 = arith.constant 0 : i32
    return %arg0, %c0_i32 : i32, i32
  }
  func.func @transform_1(%arg0: i32) -> (i32, i32) {
    %c0_i32 = arith.constant 0 : i32
    %c0_i32_0 = arith.constant 0 : i32
    return %arg0, %c0_i32 : i32, i32
  }
  func.func @transform_2(%arg0: i32) -> (i32, i32) {
    %c0_i32 = arith.constant 0 : i32
    %c0_i32_0 = arith.constant 0 : i32
    return %arg0, %c0_i32 : i32, i32
  }
}

</mosaic_0001>

<llo_original>
// kernel: tpu_custom_call.1
$region0: #{tpu_custom_call.1}
  #allocation0 [shape = 'u32[]', space=smem, size = 0x4, offset = 0x4, fixed_abs, tag = 'smem constant byte address 0x4 - core index']
  #allocation1 [shape = 'u32[72,128]{1,0:T(1,128)}', space=vmem, size = 0x9000, scoped, tag = 'internal scratch']
  %s0 = inlined_call_operand.hbm [shape: f32[8,512], index: 0, kind: input, shape index: {}]
  %s1 = inlined_call_operand.vmem [shape: f32[8,1], index: 1, kind: input, shape index: {}]
  %s2 = inlined_call_operand.hbm [shape: f32[8,512], index: 2, kind: output, shape index: {}]
  %s3 = sld [smem:[#allocation0]]
  $region22: #{tpu_custom_call.1} parent=0
    _
  %s5 = ssub.s32 1, %s3
  %s6 = scalar_select 0, %s5, %s3
  $region1: #{tpu_custom_call.1} parent=0
    #allocation2 [shape = 'u8[16384]{0}', space=vmem, size = 0x4000, scoped, tag = 'input window, operand 0, single buffered']
    #allocation3 [shape = 's32[1]{0}', space=sflag, size = 0x4, scoped, tag = 'scoped memory for tpu_custom_call.1']
    #allocation4 [shape = 's32[1]{0}', space=sflag, size = 0x4, scoped, tag = 'scoped memory for tpu_custom_call.1']
    #allocation5 [shape = 'u8[16384]{0}', space=vmem, size = 0x4000, scoped, tag = 'output window, operand 0, single buffered']
    %7 = vsyncpa [#allocation3], 0
    %8 = vsyncpa [#allocation4], 0
    // Predicated region
    $region2: #{tpu_custom_call.1} parent=1 // pred_check
      _
    $region3: #{tpu_custom_call.1} parent=1 // pred_check_branch
      %10 = sbr.rel (0) target = $region5
    $region4: #{tpu_custom_call.1} parent=1 // pred_region
      %12 = vsyncadd [#allocation3], 0
      %s14 = sshll.u32 %s0, 4
      %s15 = int_to_ptr.hbm [resolvable:$true] %s14
      %s16 = sshll.u32 [#allocation2], 4
      %s17 = int_to_ptr.vmem [resolvable:$true] %s16
      %19 = dma.hbm_to_vmem [thread:$0]  %s15, 512, %s17, [#allocation3]
    $region5: #{tpu_custom_call.1} parent=1 // pred_fallthru
      _
    // Predicated region
    $region6: #{tpu_custom_call.1} parent=1 // pred_check
      _
    $region7: #{tpu_custom_call.1} parent=1 // pred_check_branch
      %21 = sbr.rel (0) target = $region9
    $region8: #{tpu_custom_call.1} parent=1 // pred_region
      _
    $region9: #{tpu_custom_call.1} parent=1 // pred_fallthru
      _
    // Predicated region
    $region10: #{tpu_custom_call.1} parent=1 // pred_check
      _
    $region11: #{tpu_custom_call.1} parent=1 // pred_check_branch
      %23 = sbr.rel (0) target = $region13
    $region12: #{tpu_custom_call.1} parent=1 // pred_region
      %25 = dma.done [#allocation3], 512
    $region13: #{tpu_custom_call.1} parent=1 // pred_fallthru
      _
    %v26 = vld [vmem:[#allocation2] sm:$0xff]
    %v27 = vld [vmem:[#allocation2 + $0x8] sm:$0xff]
    %v28 = vld [vmem:[#allocation2 + $0x10] sm:$0xff]
    %v29 = vld [vmem:[#allocation2 + $0x18] sm:$0xff]
    %v30 = vld [vmem:[%s1] sm:$0xff]
    %32 = vset.pattern.permute.xlu0 0
    %33 = vperm.xlu0 %32, %v30
    %v34 = vpop.permute.xlu0 %33
    %v36 = vmul.f32 %v26, %v34
    %v37 = vmul.f32 %v27, %v34
    %v38 = vmul.f32 %v28, %v34
    %v39 = vmul.f32 %v29, %v34
    %40 = vst [vmem:[#allocation5] sm:$0xff] %v36
    %41 = vst [vmem:[#allocation5 + $0x8] sm:$0xff] %v37
    %42 = vst [vmem:[#allocation5 + $0x10] sm:$0xff] %v38
    %43 = vst [vmem:[#allocation5 + $0x18] sm:$0xff] %v39
    // Predicated region
    $region14: #{tpu_custom_call.1} parent=1 // pred_check
      _
    $region15: #{tpu_custom_call.1} parent=1 // pred_check_branch
      %45 = sbr.rel (0) target = $region17
    $region16: #{tpu_custom_call.1} parent=1 // pred_region
      %47 = vsyncadd [#allocation4], 0
      %s49 = sshll.u32 [#allocation5], 4
      %s50 = int_to_ptr.vmem [resolvable:$true] %s49
      %s51 = sshll.u32 %s2, 4
      %s52 = int_to_ptr.hbm [resolvable:$true] %s51
      %54 = dma.vmem_to_hbm [thread:$0]  %s50, 512, %s52, [#allocation4]
    $region17: #{tpu_custom_call.1} parent=1 // pred_fallthru
      _
    // Predicated region
    $region18: #{tpu_custom_call.1} parent=1 // pred_check
      _
    $region19: #{tpu_custom_call.1} parent=1 // pred_check_branch
      %56 = sbr.rel (0) target = $region21
    $region20: #{tpu_custom_call.1} parent=1 // pred_region
      %58 = dma.done [#allocation4], 512
    $region21: #{tpu_custom_call.1} parent=1 // pred_fallthru
      _
    %59 = vsyncpa [#allocation3], 1
    %60 = vsyncpa [#allocation4], 1

</llo_original>
